<compile_context>
chip_gen: v7x
topology: tpu7x:2x2x1
jax: 0.10.0
libtpu: 0.0.40
codegen_flags: <defaults>
</compile_context>

<pallas_src>
import functools

import jax
import jax.numpy as jnp
from jax import lax
from jax.experimental import pallas as pl
from jax.experimental.pallas import tpu as pltpu


def _round_up(a: int, b: int) -> int:
    return (a + b - 1) // b * b


# --------------------------- Kernel 1: fused QKV projection ------------------
def _qkv_proj_kernel(x_ref, w_ref, qkv_ref):
    # x_ref: (rt, d_in_p)   w_ref: (d_in_p, 3*d_out_p)   qkv_ref: (rt, 3*d_out_p)
    qkv_ref[...] = jnp.dot(
        x_ref[...], w_ref[...], preferred_element_type=jnp.float32
    ).astype(qkv_ref.dtype)


def _qkv_proj_ktiled_kernel(x_ref, w_ref, qkv_ref, acc_ref):
    # Same projection, but with a d_in (K) reduction grid axis so a huge fused
    # weight never has to be VMEM-resident at once (v7x 64 MiB VMEM guard).
    k = pl.program_id(1)

    @pl.when(k == 0)
    def _():
        acc_ref[...] = jnp.zeros_like(acc_ref)

    acc_ref[...] += jnp.dot(x_ref[...], w_ref[...],
                            preferred_element_type=jnp.float32)

    @pl.when(k == pl.num_programs(1) - 1)
    def _():
        qkv_ref[...] = acc_ref[...].astype(qkv_ref.dtype)


# --------------------------- Kernel 2: flash attention -----------------------
def _flash_attn_kernel(q_ref, k_ref, v_ref, o_ref, m_sc, l_sc, acc_sc,
                       *, seq_len, s_pad, tkv):
    kv_i = pl.program_id(1)

    @pl.when(kv_i == 0)
    def _():
        m_sc[...] = jnp.full_like(m_sc, -jnp.inf)
        l_sc[...] = jnp.zeros_like(l_sc)
        acc_sc[...] = jnp.zeros_like(acc_sc)

    # scores = q @ k^T without an explicit transpose (contract last dims);
    # bf16 operands, f32 MXU accumulation.  Q is pre-scaled by 1/sqrt(d_out).
    s = lax.dot_general(q_ref[...], k_ref[...],
                        dimension_numbers=(((1,), (1,)), ((), ())),
                        preferred_element_type=jnp.float32)          # (tq, tkv)

    def update(scores):
        m_prev = m_sc[...]
        m_new = jnp.maximum(m_prev, jnp.max(scores, axis=-1, keepdims=True))
        alpha = jnp.exp(m_prev - m_new)
        p = jnp.exp(scores - m_new)
        l_sc[...] = alpha * l_sc[...] + jnp.sum(p, axis=-1, keepdims=True)
        acc_sc[...] = alpha * acc_sc[...] + jnp.dot(
            p.astype(v_ref.dtype), v_ref[...],
            preferred_element_type=jnp.float32)
        m_sc[...] = m_new

    def masked(scores):
        kv_pos = kv_i * tkv + lax.broadcasted_iota(jnp.int32, scores.shape, 1)
        return jnp.where(kv_pos < seq_len, scores, -1e30)

    if seq_len == s_pad:
        update(s)                 # no kv padding at all: mask fully elided
    elif tkv == s_pad:
        update(masked(s))         # single resident kv block: once per q tile
    else:
        # Streamed kv tiles: only boundary / fully-padded tiles pay for the
        # mask; fully in-bounds tiles take the unmasked branch.
        boundary = (kv_i + 1) * tkv > seq_len

        @pl.when(boundary)
        def _():
            update(masked(s))

        @pl.when(jnp.logical_not(boundary))
        def _():
            update(s)

    @pl.when(kv_i == pl.num_programs(1) - 1)
    def _():
        # Exact reciprocal: runs once per q tile on a (tq,1) vector, so the
        # extra accuracy is essentially free.
        inv_l = pl.reciprocal(l_sc[...], approx=False)
        o_ref[...] = (acc_sc[...] * inv_l).astype(o_ref.dtype)


# --------------------------------- wrappers -----------------------------------
def prepare_qkv_weights(w_query, w_key, w_value, compute_dtype=jnp.bfloat16):
    """Fold 1/sqrt(d_out) into the Q weight, transpose PyTorch (d_out, d_in)
    weights to (d_in, d_out), zero-pad to lane-dense multiples of 128 and
    concatenate into a single (d_in_p, 3*d_out_p) fused weight.

    Do this once per weight set and reuse across calls (hoisted weight prep).
    """
    d_out, d_in = w_query.shape
    d_in_p = _round_up(d_in, 128)
    d_out_p = _round_up(d_out, 128)
    scale = 1.0 / (d_out ** 0.5)

    def prep(w, s):
        w = (jnp.asarray(w, jnp.float32).T * s).astype(compute_dtype)
        return jnp.pad(w, ((0, d_in_p - d_in), (0, d_out_p - d_out)))

    return jnp.concatenate(
        [prep(w_query, scale), prep(w_key, 1.0), prep(w_value, 1.0)], axis=1)


def _pick_k_tile(d_in_p, cols_p, itemsize, budget):
    """Largest multiple-of-128 divisor of d_in_p whose (tk, cols_p) weight
    block fits the VMEM budget (falls back to 128)."""
    best = 128
    for tk in range(128, d_in_p + 1, 128):
        if d_in_p % tk == 0 and tk * cols_p * itemsize <= budget:
            best = tk
    return min(best, d_in_p)


@functools.partial(
    jax.jit,
    static_argnames=("d_out", "resident_max", "tq_cap", "tkv_cap",
                     "proj_k_budget"))
def self_attention_fused(x, w_qkv, d_out, resident_max=2048,
                         tq_cap=1024, tkv_cap=512, proj_k_budget=6 << 20):
    """Attention forward given the pre-fused/padded weight from
    `prepare_qkv_weights` (hoist that call when the weights are static)."""
    S, d_in = x.shape
    out_dtype = x.dtype
    compute_dtype = w_qkv.dtype                   # bf16 by default
    d_in_p = w_qkv.shape[0]
    d_out_p = w_qkv.shape[1] // 3
    assert d_in <= d_in_p and d_out <= d_out_p

    sub = 16 if compute_dtype == jnp.bfloat16 else 8   # sublane row packing
    assert tq_cap % sub == 0 and tkv_cap % sub == 0
    assert max(tq_cap, tkv_cap) % min(tq_cap, tkv_cap) == 0

    # ---------------- attention (kernel 2) tiling ----------------
    if S <= resident_max:
        # K/V resident: a single kv block spanning the whole padded sequence.
        # Its block index is constant over the grid, so it is DMA'd from HBM
        # exactly once instead of once per q tile.
        if S <= 256:
            tq = _round_up(S, sub)
            s_pad = tq
        else:
            tq = 256                    # n_q >= 2 keeps both v7x TCs busy
            s_pad = _round_up(S, tq)
        tkv = s_pad
    else:
        # Streamed flash tiles; a large tq cuts the n_q-fold K/V re-read.
        tq, tkv = tq_cap, tkv_cap
        s_pad = _round_up(S, max(tq, tkv))
    n_q = s_pad // tq
    n_kv = s_pad // tkv

    # ---------------- projection (kernel 1) tiling ----------------
    # Memory-bound: use the largest row tile that divides s_pad (>=512 rows
    # reaches ~85% of HBM roofline) while keeping the f32 accumulator block
    # reasonable for very wide 3*d_out.
    if s_pad <= 2048:
        row_tile = s_pad
    else:
        row_tile = tq
        while row_tile < 1024 and (s_pad // row_tile) % 2 == 0:
            row_tile *= 2
    while (row_tile > 256 and row_tile % 2 == 0
           and row_tile * 3 * d_out_p * 4 > (8 << 20)):
        row_tile //= 2
    n_rows = s_pad // row_tile

    tk_in = _pick_k_tile(d_in_p, 3 * d_out_p, w_qkv.dtype.itemsize,
                         proj_k_budget)
    n_k = d_in_p // tk_in

    x_p = jnp.pad(x.astype(compute_dtype),
                  ((0, s_pad - S), (0, d_in_p - d_in)))

    # ---- Kernel 1: fused QKV projection (bf16 out, f32 accumulation) ----
    qkv_shape = jax.ShapeDtypeStruct((s_pad, 3 * d_out_p), compute_dtype)
    if n_k == 1:
        qkv = pl.pallas_call(
            _qkv_proj_kernel,
            out_shape=qkv_shape,
            grid_spec=pltpu.PrefetchScalarGridSpec(
                num_scalar_prefetch=0,
                grid=(n_rows,),
                in_specs=[
                    pl.BlockSpec((row_tile, d_in_p), lambda i: (i, 0)),
                    pl.BlockSpec((d_in_p, 3 * d_out_p), lambda i: (0, 0)),
                ],
                out_specs=pl.BlockSpec((row_tile, 3 * d_out_p),
                                       lambda i: (i, 0)),
            ),
            compiler_params=pltpu.CompilerParams(
                dimension_semantics=("parallel",)),
        )(x_p, w_qkv)
    else:
        # d_in-tiled reduction keeps the weight block small enough for the
        # v7x 64 MiB VMEM (32 MiB scoped default) even for huge d_in/d_out.
        qkv = pl.pallas_call(
            _qkv_proj_ktiled_kernel,
            out_shape=qkv_shape,
            grid_spec=pltpu.PrefetchScalarGridSpec(
                num_scalar_prefetch=0,
                grid=(n_rows, n_k),
                in_specs=[
                    pl.BlockSpec((row_tile, tk_in), lambda i, k: (i, k)),
                    pl.BlockSpec((tk_in, 3 * d_out_p), lambda i, k: (k, 0)),
                ],
                out_specs=pl.BlockSpec((row_tile, 3 * d_out_p),
                                       lambda i, k: (i, 0)),
                scratch_shapes=[
                    pltpu.VMEM((row_tile, 3 * d_out_p), jnp.float32)],
            ),
            compiler_params=pltpu.CompilerParams(
                dimension_semantics=("parallel", "arbitrary")),
        )(x_p, w_qkv)

    # ---- Kernel 2: flash attention over a (q_tile, kv_tile) grid ----
    # The same qkv array is passed three times; the column block index picks
    # the Q (0), K (1) or V (2) slab, so no host-side slicing is needed.
    kernel = functools.partial(_flash_attn_kernel,
                               seq_len=S, s_pad=s_pad, tkv=tkv)
    out_pad = pl.pallas_call(
        kernel,
        out_shape=jax.ShapeDtypeStruct((s_pad, d_out_p), out_dtype),
        grid_spec=pltpu.PrefetchScalarGridSpec(
            num_scalar_prefetch=0,
            grid=(n_q, n_kv),
            in_specs=[
                pl.BlockSpec((tq, d_out_p), lambda i, j: (i, 0)),    # Q
                pl.BlockSpec((tkv, d_out_p), lambda i, j: (j, 1)),   # K
                pl.BlockSpec((tkv, d_out_p), lambda i, j: (j, 2)),   # V
            ],
            out_specs=pl.BlockSpec((tq, d_out_p), lambda i, j: (i, 0)),
            scratch_shapes=[
                pltpu.VMEM((tq, 1), jnp.float32),        # running max
                pltpu.VMEM((tq, 1), jnp.float32),        # running sum
                pltpu.VMEM((tq, d_out_p), jnp.float32),  # output accumulator
            ],
        ),
        compiler_params=pltpu.CompilerParams(
            dimension_semantics=("parallel", "arbitrary")),
    )(qkv, qkv, qkv)

    return out_pad[:S, :d_out]


def self_attention(x, w_query, w_key, w_value):
    """Drop-in forward from raw PyTorch-layout (d_out, d_in) weights.

    TODO(synk): when the weights are static across calls, hoist
    prepare_qkv_weights out of the per-call path and call
    self_attention_fused directly (as done in __main__).
    """
    w_qkv = prepare_qkv_weights(w_query, w_key, w_value)
    return self_attention_fused(x, w_qkv, d_out=w_query.shape[0])


def self_attention_ref(x, w_query, w_key, w_value):
    q = x @ w_query.T
    k = x @ w_key.T
    v = x @ w_value.T
    scores = q @ k.T
    w = jax.nn.softmax(scores / (k.shape[-1] ** 0.5), axis=-1)
    return w @ v


if __name__ == "__main__":
    def run_case(S, d_in, d_out, **static_tiles):
        key = jax.random.PRNGKey(0)
        kx, kq, kk, kv = jax.random.split(key, 4)
        x = jax.random.normal(kx, (S, d_in), dtype=jnp.float32)
        # deterministic "Kaiming-uniform-like" init, PyTorch weight shape (d_out, d_in)
        bound = 1.0 / (d_in ** 0.5)
        w_q = jax.random.uniform(kq, (d_out, d_in), jnp.float32, -bound, bound)
        w_k = jax.random.uniform(kk, (d_out, d_in), jnp.float32, -bound, bound)
        w_v = jax.random.uniform(kv, (d_out, d_in), jnp.float32, -bound, bound)

        # Hoisted weight prep (once per weight set), then the fused kernels.
        w_qkv = prepare_qkv_weights(w_q, w_k, w_v)
        out = jax.block_until_ready(
            self_attention_fused(x, w_qkv, d_out=d_out, **static_tiles))
        ref = self_attention_ref(x, w_q, w_k, w_v)

        assert out.shape == (S, d_out)
        err = float(jnp.max(jnp.abs(out - ref)))
        # tolerance covers the bf16 Q/K/V compute path (accumulation is f32)
        assert jnp.allclose(out, ref, atol=2e-2, rtol=2e-2), (
            f"mismatch vs reference at S={S}: max abs err {err:.3e}")

    # Small shapes implied by the module (seq=8, d_in=32, d_out=16):
    # resident-K/V path, single q/kv block.
    run_case(8, 32, 16)

    # Also exercise the streamed flash path (padding mask under pl.when,
    # n_q > 1) and the d_in-tiled projection, still at small shapes.
    run_case(200, 256, 48, resident_max=0, tq_cap=64, tkv_cap=64,
             proj_k_budget=100_000)

    print("KERNEL_OK")
</pallas_src>

<mosaic_0001>
module attributes {stable_mosaic.version = 11 : i64} {
  func.func @_qkv_proj_kernel(%arg0: i32, %arg1: memref<16x128xbf16, #tpu.memory_space<vmem>>, %arg2: memref<128x384xbf16, #tpu.memory_space<vmem>>, %arg3: memref<16x384xbf16, #tpu.memory_space<vmem>>) attributes {dimension_semantics = [#tpu.dimension_semantics<parallel>], iteration_bounds = array<i64: 1>, scalar_prefetch = 0 : i64, scratch_operands = 0 : i64, tpu.core_type = #tpu.core_type<tc>, window_params = [{transform_indices = @transform_0, window_bounds = array<i64: 16, 128>}, {pipeline_mode = #tpu.pipeline_mode<synchronous>, transform_indices = @transform_1, window_bounds = array<i64: 128, 384>}, {transform_indices = @transform_2, window_bounds = array<i64: 16, 384>}]} {
    %c0 = arith.constant 0 : index
    %c0_0 = arith.constant 0 : index
    %0 = vector.load %arg1[%c0, %c0_0] : memref<16x128xbf16, #tpu.memory_space<vmem>>, vector<16x128xbf16>
    %c0_1 = arith.constant 0 : index
    %c0_2 = arith.constant 0 : index
    %1 = vector.load %arg2[%c0_1, %c0_2] : memref<128x384xbf16, #tpu.memory_space<vmem>>, vector<128x384xbf16>
    %cst = arith.constant dense<0.000000e+00> : vector<16x384xf32>
    %2 = tpu.matmul %0, %1, %cst {dimension_numbers = #tpu.dot_dimension_numbers<[1], [0], [0], [1], [0, 0, 1, 1], [], []>} : vector<16x128xbf16>, vector<128x384xbf16>, vector<16x384xf32> -> vector<16x384xf32>
    %3 = arith.truncf %2 : vector<16x384xf32> to vector<16x384xbf16>
    %c0_3 = arith.constant 0 : index
    %c0_4 = arith.constant 0 : index
    %4 = vector.load %arg3[%c0_3, %c0_4] : memref<16x384xbf16, #tpu.memory_space<vmem>>, vector<16x384xbf16>
    tpu.vector_store %arg3[%c0_3, %c0_4], %3 {strides = array<i32>} : memref<16x384xbf16, #tpu.memory_space<vmem>>, vector<16x384xbf16>,
    return
  }
  func.func @transform_0(%arg0: i32) -> (i32, i32) {
    %c0_i32 = arith.constant 0 : i32
    %c0_i32_0 = arith.constant 0 : i32
    return %arg0, %c0_i32 : i32, i32
  }
  func.func @transform_1(%arg0: i32) -> (i32, i32) {
    %c0_i32 = arith.constant 0 : i32
    %c0_i32_0 = arith.constant 0 : i32
    %c0_i32_1 = arith.constant 0 : i32
    return %c0_i32, %c0_i32_0 : i32, i32
  }
  func.func @transform_2(%arg0: i32) -> (i32, i32) {
    %c0_i32 = arith.constant 0 : i32
    %c0_i32_0 = arith.constant 0 : i32
    return %arg0, %c0_i32 : i32, i32
  }
}

module attributes {stable_mosaic.version = 11 : i64} {
  func.func @_flash_attn_kernel(%arg0: i32, %arg1: i32, %arg2: memref<16x128xbf16, #tpu.memory_space<vmem>>, %arg3: memref<16x128xbf16, #tpu.memory_space<vmem>>, %arg4: memref<16x128xbf16, #tpu.memory_space<vmem>>, %arg5: memref<16x128xf32, #tpu.memory_space<vmem>>, %arg6: memref<16x1xf32, #tpu.memory_space<vmem>>, %arg7: memref<16x1xf32, #tpu.memory_space<vmem>>, %arg8: memref<16x128xf32, #tpu.memory_space<vmem>>) attributes {dimension_semantics = [#tpu.dimension_semantics<parallel>, #tpu.dimension_semantics<arbitrary>], iteration_bounds = array<i64: 1, 1>, scalar_prefetch = 0 : i64, scratch_operands = 3 : i64, tpu.core_type = #tpu.core_type<tc>, window_params = [{transform_indices = @transform_0, window_bounds = array<i64: 16, 128>}, {transform_indices = @transform_1, window_bounds = array<i64: 16, 128>}, {transform_indices = @transform_2, window_bounds = array<i64: 16, 128>}, {transform_indices = @transform_3, window_bounds = array<i64: 16, 128>}]} {
    %c0_i32 = arith.constant 0 : i32
    %0 = arith.cmpi eq, %arg1, %c0_i32 : i32
    %1 = arith.extui %0 : i1 to i32
    %c0_i32_0 = arith.constant 0 : i32
    %2 = arith.cmpi ne, %1, %c0_i32_0 : i32
    scf.if %2 {
      %cst_24 = arith.constant 0xFF800000 : f32
      %41 = vector.broadcast %cst_24 : f32 to vector<16x1xf32>
      %c0_25 = arith.constant 0 : index
      %c0_26 = arith.constant 0 : index
      %42 = vector.load %arg6[%c0_25, %c0_26] : memref<16x1xf32, #tpu.memory_space<vmem>>, vector<16x1xf32>
      tpu.vector_store %arg6[%c0_25, %c0_26], %41 {strides = array<i32>} : memref<16x1xf32, #tpu.memory_space<vmem>>, vector<16x1xf32>,
      %cst_27 = arith.constant 0.000000e+00 : f32
      %43 = vector.broadcast %cst_27 : f32 to vector<16x1xf32>
      %c0_28 = arith.constant 0 : index
      %c0_29 = arith.constant 0 : index
      %44 = vector.load %arg7[%c0_28, %c0_29] : memref<16x1xf32, #tpu.memory_space<vmem>>, vector<16x1xf32>
      tpu.vector_store %arg7[%c0_28, %c0_29], %43 {strides = array<i32>} : memref<16x1xf32, #tpu.memory_space<vmem>>, vector<16x1xf32>,
      %cst_30 = arith.constant 0.000000e+00 : f32
      %45 = vector.broadcast %cst_30 : f32 to vector<16x128xf32>
      %c0_31 = arith.constant 0 : index
      %c0_32 = arith.constant 0 : index
      %46 = vector.load %arg8[%c0_31, %c0_32] : memref<16x128xf32, #tpu.memory_space<vmem>>, vector<16x128xf32>
      tpu.vector_store %arg8[%c0_31, %c0_32], %45 {strides = array<i32>} : memref<16x128xf32, #tpu.memory_space<vmem>>, vector<16x128xf32>,
    } else {
    }
    %c0 = arith.constant 0 : index
    %c0_1 = arith.constant 0 : index
    %3 = vector.load %arg2[%c0, %c0_1] : memref<16x128xbf16, #tpu.memory_space<vmem>>, vector<16x128xbf16>
    %c0_2 = arith.constant 0 : index
    %c0_3 = arith.constant 0 : index
    %4 = vector.load %arg3[%c0_2, %c0_3] : memref<16x128xbf16, #tpu.memory_space<vmem>>, vector<16x128xbf16>
    %cst = arith.constant dense<0.000000e+00> : vector<16x16xf32>
    %5 = tpu.matmul %3, %4, %cst {dimension_numbers = #tpu.dot_dimension_numbers<[1], [1], [0], [0], [0, 0, 1, 0], [], []>} : vector<16x128xbf16>, vector<16x128xbf16>, vector<16x16xf32> -> vector<16x16xf32>
    %c16_i32 = arith.constant 16 : i32
    %6 = arith.muli %arg1, %c16_i32 : i32
    %7 = tpu.iota {dimensions = array<i32: 1>} : vector<16x16xi32>
    %8 = vector.broadcast %6 : i32 to vector<16x16xi32>
    %9 = arith.addi %8, %7 : vector<16x16xi32>
    %c8_i32 = arith.constant 8 : i32
    %10 = vector.broadcast %c8_i32 : i32 to vector<16x16xi32>
    %11 = arith.cmpi slt, %9, %10 : vector<16x16xi32>
    %cst_4 = arith.constant -1.000000e+30 : f32
    %12 = vector.broadcast %cst_4 : f32 to vector<16x16xf32>
    %13 = arith.select %11, %5, %12 : vector<16x16xi1>, vector<16x16xf32>
    %c0_5 = arith.constant 0 : index
    %c0_6 = arith.constant 0 : index
    %14 = vector.load %arg6[%c0_5, %c0_6] : memref<16x1xf32, #tpu.memory_space<vmem>>, vector<16x1xf32>
    %cst_7 = arith.constant dense<0xFF800000> : vector<16xf32>
    %15 = vector.multi_reduction <maximumf>, %13, %cst_7 [1] : vector<16x16xf32> to vector<16xf32>
    %16 = vector.shape_cast %15 : vector<16xf32> to vector<16x1xf32>
    %17 = arith.maximumf %14, %16 : vector<16x1xf32>
    %18 = arith.subf %14, %17 : vector<16x1xf32>
    %19 = math.exp %18 : vector<16x1xf32>
    %20 = vector.broadcast %17 : vector<16x1xf32> to vector<16x16xf32>
    %21 = arith.subf %13, %20 : vector<16x16xf32>
    %22 = math.exp %21 : vector<16x16xf32>
    %c0_8 = arith.constant 0 : index
    %c0_9 = arith.constant 0 : index
    %23 = vector.load %arg7[%c0_8, %c0_9] : memref<16x1xf32, #tpu.memory_space<vmem>>, vector<16x1xf32>
    %24 = arith.mulf %19, %23 : vector<16x1xf32>
    %cst_10 = arith.constant dense<0.000000e+00> : vector<16xf32>
    %25 = vector.multi_reduction <add>, %22, %cst_10 [1] : vector<16x16xf32> to vector<16xf32>
    %26 = vector.shape_cast %25 : vector<16xf32> to vector<16x1xf32>
    %27 = arith.addf %24, %26 : vector<16x1xf32>
    %c0_11 = arith.constant 0 : index
    %c0_12 = arith.constant 0 : index
    %28 = vector.load %arg7[%c0_11, %c0_12] : memref<16x1xf32, #tpu.memory_space<vmem>>, vector<16x1xf32>
    tpu.vector_store %arg7[%c0_11, %c0_12], %27 {strides = array<i32>} : memref<16x1xf32, #tpu.memory_space<vmem>>, vector<16x1xf32>,
    %c0_13 = arith.constant 0 : index
    %c0_14 = arith.constant 0 : index
    %29 = vector.load %arg8[%c0_13, %c0_14] : memref<16x128xf32, #tpu.memory_space<vmem>>, vector<16x128xf32>
    %30 = vector.broadcast %19 : vector<16x1xf32> to vector<16x128xf32>
    %31 = arith.mulf %30, %29 : vector<16x128xf32>
    %32 = arith.truncf %22 : vector<16x16xf32> to vector<16x16xbf16>
    %c0_15 = arith.constant 0 : index
    %c0_16 = arith.constant 0 : index
    %33 = vector.load %arg4[%c0_15, %c0_16] : memref<16x128xbf16, #tpu.memory_space<vmem>>, vector<16x128xbf16>
    %cst_17 = arith.constant dense<0.000000e+00> : vector<16x128xf32>
    %34 = tpu.matmul %32, %33, %cst_17 {dimension_numbers = #tpu.dot_dimension_numbers<[1], [0], [0], [1], [0, 0, 1, 1], [], []>} : vector<16x16xbf16>, vector<16x128xbf16>, vector<16x128xf32> -> vector<16x128xf32>
    %35 = arith.addf %31, %34 : vector<16x128xf32>
    %c0_18 = arith.constant 0 : index
    %c0_19 = arith.constant 0 : index
    %36 = vector.load %arg8[%c0_18, %c0_19] : memref<16x128xf32, #tpu.memory_space<vmem>>, vector<16x128xf32>
    tpu.vector_store %arg8[%c0_18, %c0_19], %35 {strides = array<i32>} : memref<16x128xf32, #tpu.memory_space<vmem>>, vector<16x128xf32>,
    %c0_20 = arith.constant 0 : index
    %c0_21 = arith.constant 0 : index
    %37 = vector.load %arg6[%c0_20, %c0_21] : memref<16x1xf32, #tpu.memory_space<vmem>>, vector<16x1xf32>
    tpu.vector_store %arg6[%c0_20, %c0_21], %17 {strides = array<i32>} : memref<16x1xf32, #tpu.memory_space<vmem>>, vector<16x1xf32>,
    %c0_i32_22 = arith.constant 0 : i32
    %38 = arith.cmpi eq, %arg1, %c0_i32_22 : i32
    %39 = arith.extui %38 : i1 to i32
    %c0_i32_23 = arith.constant 0 : i32
    %40 = arith.cmpi ne, %39, %c0_i32_23 : i32
    scf.if %40 {
      %c0_24 = arith.constant 0 : index
      %c0_25 = arith.constant 0 : index
      %41 = vector.load %arg7[%c0_24, %c0_25] : memref<16x1xf32, #tpu.memory_space<vmem>>, vector<16x1xf32>
      %42 = tpu.reciprocal %41 : vector<16x1xf32> -> vector<16x1xf32>
      %c0_26 = arith.constant 0 : index
      %c0_27 = arith.constant 0 : index
      %43 = vector.load %arg8[%c0_26, %c0_27] : memref<16x128xf32, #tpu.memory_space<vmem>>, vector<16x128xf32>
      %44 = vector.broadcast %42 : vector<16x1xf32> to vector<16x128xf32>
      %45 = arith.mulf %43, %44 : vector<16x128xf32>
      %c0_28 = arith.constant 0 : index
      %c0_29 = arith.constant 0 : index
      %46 = vector.load %arg5[%c0_28, %c0_29] : memref<16x128xf32, #tpu.memory_space<vmem>>, vector<16x128xf32>
      tpu.vector_store %arg5[%c0_28, %c0_29], %45 {strides = array<i32>} : memref<16x128xf32, #tpu.memory_space<vmem>>, vector<16x128xf32>,
    } else {
    }
    return
  }
  func.func @transform_0(%arg0: i32, %arg1: i32) -> (i32, i32) {
    %c0_i32 = arith.constant 0 : i32
    %c0_i32_0 = arith.constant 0 : i32
    return %arg0, %c0_i32 : i32, i32
  }
  func.func @transform_1(%arg0: i32, %arg1: i32) -> (i32, i32) {
    %c1_i32 = arith.constant 1 : i32
    %c0_i32 = arith.constant 0 : i32
    return %arg1, %c1_i32 : i32, i32
  }
  func.func @transform_2(%arg0: i32, %arg1: i32) -> (i32, i32) {
    %c2_i32 = arith.constant 2 : i32
    %c0_i32 = arith.constant 0 : i32
    return %arg1, %c2_i32 : i32, i32
  }
  func.func @transform_3(%arg0: i32, %arg1: i32) -> (i32, i32) {
    %c0_i32 = arith.constant 0 : i32
    %c0_i32_0 = arith.constant 0 : i32
    return %arg0, %c0_i32 : i32, i32
  }
}

</mosaic_0001>

<llo_original>
// kernel: self_attention_fused.3
$region0: #{self_attention_fused.3}
  #allocation0 [shape = 'u32[]', space=smem, size = 0x4, offset = 0x4, fixed_abs, tag = 'smem constant byte address 0x4 - core index']
  #allocation1 [shape = 'u32[144,128]{1,0:T(1,128)}', space=vmem, size = 0x12000, scoped, tag = 'internal scratch']
  #allocation2 [shape = 'f32[16,1]{1,0:T(8,128)}', space=vmem, size = 0x2000, scoped, tag = 'scratch operand']
  #allocation3 [shape = 'f32[16,1]{1,0:T(8,128)}', space=vmem, size = 0x2000, scoped, tag = 'scratch operand']
  #allocation4 [shape = 'f32[16,128]{1,0:T(8,128)}', space=vmem, size = 0x2000, scoped, tag = 'scratch operand']
  %s0 = inlined_call_operand.vmem [shape: bf16[16,384], index: 0, kind: input, shape index: {}, may-alias: {0,1,2}]
  %s1 = inlined_call_operand.vmem [shape: bf16[16,384], index: 1, kind: input, shape index: {}, may-alias: {0,1,2}]
  %s2 = inlined_call_operand.vmem [shape: bf16[16,384], index: 2, kind: input, shape index: {}, may-alias: {0,1,2}]
  %s3 = inlined_call_operand.vmem [shape: f32[16,128], index: 3, kind: output, shape index: {}]
  %s4 = sld [smem:[#allocation0]]
  $region153: #{self_attention_fused.3} parent=0
    _
  %s6 = ssub.s32 1, %s4
  %s7 = scalar_select 0, %s6, %s4
  $region1: #{self_attention_fused.3} parent=0
    #allocation5 [shape = 'u8[4096]{0}', space=vmem, size = 0x1000, scoped, tag = 'input window, operand 0, single buffered']
    #allocation6 [shape = 'u8[4096]{0}', space=vmem, size = 0x1000, scoped, tag = 'input window, operand 1, single buffered']
    #allocation7 [shape = 'u8[4096]{0}', space=vmem, size = 0x1000, scoped, tag = 'input window, operand 2, single buffered']
    // Predicated region
    $region2: #{self_attention_fused.3} parent=1 // pred_check
      _
    $region3: #{self_attention_fused.3} parent=1 // pred_check_branch
      %9 = sbr.rel (0) target = $region5
    $region4: #{self_attention_fused.3} parent=1 // pred_region
      // Predicated region
      $region6: #{self_attention_fused.3} parent=4 // pred_check
        _
      $region7: #{self_attention_fused.3} parent=4 // pred_check_branch
        %11 = sbr.rel (0) target = $region9
      $region8: #{self_attention_fused.3} parent=4 // pred_region
        // Predicated region
        $region10: #{self_attention_fused.3} parent=8 // pred_check
          _
        $region11: #{self_attention_fused.3} parent=8 // pred_check_branch
          %13 = sbr.rel target = $region13
        $region12: #{self_attention_fused.3} parent=8 // pred_region
          // Predicated region
          $region25: #{self_attention_fused.3} parent=12 // pred_check
            _
          $region26: #{self_attention_fused.3} parent=12 // pred_check_branch
            %30 = sbr.rel (0) target = $region28
          $region27: #{self_attention_fused.3} parent=12 // pred_region
            loop: start=0, step=1, limit=1
            $region29: #{self_attention_fused.3} parent=27 // loop_pre_header
              _
            $region30: #{self_attention_fused.3} parent=27 // loop_header
              %s32 = sphi 0, %s36
              %p33 = scmp.ge.s32.totalorder %s32, 1
              %s37 = sphi %s0, %s0
              %s38 = sphi [#allocation5], [#allocation5]
            $region31: #{self_attention_fused.3} parent=27 // loop_header_branch
              %35 = sbr.rel (%p33) target = $region35
            $region32: #{self_attention_fused.3} parent=27 // loop_body
              _
            $region33: #{self_attention_fused.3} parent=27 // loop_footer
              %s36 = sadd.s32 1, %s32
            $region34: #{self_attention_fused.3} parent=27 // loop_footer_branch
              %31 = sbr.rel target = $region30
            $region35: #{self_attention_fused.3} parent=27 // loop_exit
              _
            loop: start=0, step=1, limit=1
            $region36: #{self_attention_fused.3} parent=27 // loop_pre_header
              _
            $region37: #{self_attention_fused.3} parent=27 // loop_header
              %s41 = sphi 0, %s45
              %p42 = scmp.ge.s32.totalorder %s41, 1
              %s46 = sphi %s0, %s0
              %s47 = sphi [#allocation5], [#allocation5]
            $region38: #{self_attention_fused.3} parent=27 // loop_header_branch
              %44 = sbr.rel (%p42) target = $region42
            $region39: #{self_attention_fused.3} parent=27 // loop_body
              %v48 = vld [vmem:[%s46] sm:$0xf]
              %49 = vst [vmem:[%s47] sm:$0xf] %v48
              %v50 = vld [vmem:[%s46 + $0xc] sm:$0xf]
              %51 = vst [vmem:[%s47 + $0x4] sm:$0xf] %v50
            $region40: #{self_attention_fused.3} parent=27 // loop_footer
              %s45 = sadd.s32 1, %s41
            $region41: #{self_attention_fused.3} parent=27 // loop_footer_branch
              %40 = sbr.rel target = $region37
            $region42: #{self_attention_fused.3} parent=27 // loop_exit
              _
          $region28: #{self_attention_fused.3} parent=12 // pred_fallthru
            _
        $region13: #{self_attention_fused.3} parent=8 // pred_fallthru
          _
        // Predicated region
        $region14: #{self_attention_fused.3} parent=8 // pred_check
          _
        $region15: #{self_attention_fused.3} parent=8 // pred_check_branch
          %15 = sbr.rel (0) target = $region17
        $region16: #{self_attention_fused.3} parent=8 // pred_region
          loop: start=0, step=1, limit=1
          $region18: #{self_attention_fused.3} parent=16 // loop_pre_header
            _
          $region19: #{self_attention_fused.3} parent=16 // loop_header
            %s18 = sphi 0, %s22
            %p19 = scmp.ge.s32.totalorder %s18, 1
            %s23 = sphi %s0, %s0
            %s24 = sphi [#allocation5], [#allocation5]
          $region20: #{self_attention_fused.3} parent=16 // loop_header_branch
            %21 = sbr.rel (%p19) target = $region24
          $region21: #{self_attention_fused.3} parent=16 // loop_body
            %v25 = vld [vmem:[%s23] sm:$0xf]
            %26 = vst [vmem:[%s24] sm:$0xf] %v25
            %v27 = vld [vmem:[%s23 + $0xc] sm:$0xf]
            %28 = vst [vmem:[%s24 + $0x4] sm:$0xf] %v27
          $region22: #{self_attention_fused.3} parent=16 // loop_footer
            %s22 = sadd.s32 1, %s18
          $region23: #{self_attention_fused.3} parent=16 // loop_footer_branch
            %17 = sbr.rel target = $region19
          $region24: #{self_attention_fused.3} parent=16 // loop_exit
            _
        $region17: #{self_attention_fused.3} parent=8 // pred_fallthru
          _
      $region9: #{self_attention_fused.3} parent=4 // pred_fallthru
        _
      %52 = vnop
    $region5: #{self_attention_fused.3} parent=1 // pred_fallthru
      _
    // Predicated region
    $region43: #{self_attention_fused.3} parent=1 // pred_check
      _
    $region44: #{self_attention_fused.3} parent=1 // pred_check_branch
      %54 = sbr.rel (0) target = $region46
    $region45: #{self_attention_fused.3} parent=1 // pred_region
      %s55 = scalar_lea.vmem %s1, 4
      // Predicated region
      $region47: #{self_attention_fused.3} parent=45 // pred_check
        _
      $region48: #{self_attention_fused.3} parent=45 // pred_check_branch
        %57 = sbr.rel (0) target = $region50
      $region49: #{self_attention_fused.3} parent=45 // pred_region
        // Predicated region
        $region51: #{self_attention_fused.3} parent=49 // pred_check
          _
        $region52: #{self_attention_fused.3} parent=49 // pred_check_branch
          %59 = sbr.rel target = $region54
        $region53: #{self_attention_fused.3} parent=49 // pred_region
          // Predicated region
          $region66: #{self_attention_fused.3} parent=53 // pred_check
            _
          $region67: #{self_attention_fused.3} parent=53 // pred_check_branch
            %76 = sbr.rel (0) target = $region69
          $region68: #{self_attention_fused.3} parent=53 // pred_region
            loop: start=0, step=1, limit=1
            $region70: #{self_attention_fused.3} parent=68 // loop_pre_header
              _
            $region71: #{self_attention_fused.3} parent=68 // loop_header
              %s78 = sphi 0, %s82
              %p79 = scmp.ge.s32.totalorder %s78, 1
              %s83 = sphi %s55, %s55
              %s84 = sphi [#allocation6], [#allocation6]
            $region72: #{self_attention_fused.3} parent=68 // loop_header_branch
              %81 = sbr.rel (%p79) target = $region76
            $region73: #{self_attention_fused.3} parent=68 // loop_body
              _
            $region74: #{self_attention_fused.3} parent=68 // loop_footer
              %s82 = sadd.s32 1, %s78
            $region75: #{self_attention_fused.3} parent=68 // loop_footer_branch
              %77 = sbr.rel target = $region71
            $region76: #{self_attention_fused.3} parent=68 // loop_exit
              _
            loop: start=0, step=1, limit=1
            $region77: #{self_attention_fused.3} parent=68 // loop_pre_header
              _
            $region78: #{self_attention_fused.3} parent=68 // loop_header
              %s87 = sphi 0, %s91
              %p88 = scmp.ge.s32.totalorder %s87, 1
              %s92 = sphi %s55, %s55
              %s93 = sphi [#allocation6], [#allocation6]
            $region79: #{self_attention_fused.3} parent=68 // loop_header_branch
              %90 = sbr.rel (%p88) target = $region83
            $region80: #{self_attention_fused.3} parent=68 // loop_body
              %v94 = vld [vmem:[%s92] sm:$0xf]
              %95 = vst [vmem:[%s93] sm:$0xf] %v94
              %v96 = vld [vmem:[%s92 + $0xc] sm:$0xf]
              %97 = vst [vmem:[%s93 + $0x4] sm:$0xf] %v96
            $region81: #{self_attention_fused.3} parent=68 // loop_footer
              %s91 = sadd.s32 1, %s87
            $region82: #{self_attention_fused.3} parent=68 // loop_footer_branch
              %86 = sbr.rel target = $region78
            $region83: #{self_attention_fused.3} parent=68 // loop_exit
              _
          $region69: #{self_attention_fused.3} parent=53 // pred_fallthru
            _
        $region54: #{self_attention_fused.3} parent=49 // pred_fallthru
          _
        // Predicated region
        $region55: #{self_attention_fused.3} parent=49 // pred_check
          _
        $region56: #{self_attention_fused.3} parent=49 // pred_check_branch
          %61 = sbr.rel (0) target = $region58
        $region57: #{self_attention_fused.3} parent=49 // pred_region
          loop: start=0, step=1, limit=1
          $region59: #{self_attention_fused.3} parent=57 // loop_pre_header
            _
          $region60: #{self_attention_fused.3} parent=57 // loop_header
            %s64 = sphi 0, %s68
            %p65 = scmp.ge.s32.totalorder %s64, 1
            %s69 = sphi %s55, %s55
            %s70 = sphi [#allocation6], [#allocation6]
          $region61: #{self_attention_fused.3} parent=57 // loop_header_branch
            %67 = sbr.rel (%p65) target = $region65
          $region62: #{self_attention_fused.3} parent=57 // loop_body
            %v71 = vld [vmem:[%s69] sm:$0xf]
            %72 = vst [vmem:[%s70] sm:$0xf] %v71
            %v73 = vld [vmem:[%s69 + $0xc] sm:$0xf]
            %74 = vst [vmem:[%s70 + $0x4] sm:$0xf] %v73
          $region63: #{self_attention_fused.3} parent=57 // loop_footer
            %s68 = sadd.s32 1, %s64
          $region64: #{self_attention_fused.3} parent=57 // loop_footer_branch
            %63 = sbr.rel target = $region60
          $region65: #{self_attention_fused.3} parent=57 // loop_exit
            _
        $region58: #{self_attention_fused.3} parent=49 // pred_fallthru
          _
      $region50: #{self_attention_fused.3} parent=45 // pred_fallthru
        _
      %98 = vnop
    $region46: #{self_attention_fused.3} parent=1 // pred_fallthru
      _
    // Predicated region
    $region84: #{self_attention_fused.3} parent=1 // pred_check
      _
    $region85: #{self_attention_fused.3} parent=1 // pred_check_branch
      %100 = sbr.rel (0) target = $region87
    $region86: #{self_attention_fused.3} parent=1 // pred_region
      %s101 = scalar_lea.vmem %s2, 8
      // Predicated region
      $region88: #{self_attention_fused.3} parent=86 // pred_check
        _
      $region89: #{self_attention_fused.3} parent=86 // pred_check_branch
        %103 = sbr.rel (0) target = $region91
      $region90: #{self_attention_fused.3} parent=86 // pred_region
        // Predicated region
        $region92: #{self_attention_fused.3} parent=90 // pred_check
          _
        $region93: #{self_attention_fused.3} parent=90 // pred_check_branch
          %105 = sbr.rel target = $region95
        $region94: #{self_attention_fused.3} parent=90 // pred_region
          // Predicated region
          $region107: #{self_attention_fused.3} parent=94 // pred_check
            _
          $region108: #{self_attention_fused.3} parent=94 // pred_check_branch
            %122 = sbr.rel (0) target = $region110
          $region109: #{self_attention_fused.3} parent=94 // pred_region
            loop: start=0, step=1, limit=1
            $region111: #{self_attention_fused.3} parent=109 // loop_pre_header
              _
            $region112: #{self_attention_fused.3} parent=109 // loop_header
              %s124 = sphi 0, %s128
              %p125 = scmp.ge.s32.totalorder %s124, 1
              %s129 = sphi %s101, %s101
              %s130 = sphi [#allocation7], [#allocation7]
            $region113: #{self_attention_fused.3} parent=109 // loop_header_branch
              %127 = sbr.rel (%p125) target = $region117
            $region114: #{self_attention_fused.3} parent=109 // loop_body
              _
            $region115: #{self_attention_fused.3} parent=109 // loop_footer
              %s128 = sadd.s32 1, %s124
            $region116: #{self_attention_fused.3} parent=109 // loop_footer_branch
              %123 = sbr.rel target = $region112
            $region117: #{self_attention_fused.3} parent=109 // loop_exit
              _
            loop: start=0, step=1, limit=1
            $region118: #{self_attention_fused.3} parent=109 // loop_pre_header
              _
            $region119: #{self_attention_fused.3} parent=109 // loop_header
              %s133 = sphi 0, %s137
              %p134 = scmp.ge.s32.totalorder %s133, 1
              %s138 = sphi %s101, %s101
              %s139 = sphi [#allocation7], [#allocation7]
            $region120: #{self_attention_fused.3} parent=109 // loop_header_branch
              %136 = sbr.rel (%p134) target = $region124
            $region121: #{self_attention_fused.3} parent=109 // loop_body
              %v140 = vld [vmem:[%s138] sm:$0xf]
              %141 = vst [vmem:[%s139] sm:$0xf] %v140
              %v142 = vld [vmem:[%s138 + $0xc] sm:$0xf]
              %143 = vst [vmem:[%s139 + $0x4] sm:$0xf] %v142
            $region122: #{self_attention_fused.3} parent=109 // loop_footer
              %s137 = sadd.s32 1, %s133
            $region123: #{self_attention_fused.3} parent=109 // loop_footer_branch
              %132 = sbr.rel target = $region119
            $region124: #{self_attention_fused.3} parent=109 // loop_exit
              _
          $region110: #{self_attention_fused.3} parent=94 // pred_fallthru
            _
        $region95: #{self_attention_fused.3} parent=90 // pred_fallthru
          _
        // Predicated region
        $region96: #{self_attention_fused.3} parent=90 // pred_check
          _
        $region97: #{self_attention_fused.3} parent=90 // pred_check_branch
          %107 = sbr.rel (0) target = $region99
        $region98: #{self_attention_fused.3} parent=90 // pred_region
          loop: start=0, step=1, limit=1
          $region100: #{self_attention_fused.3} parent=98 // loop_pre_header
            _
          $region101: #{self_attention_fused.3} parent=98 // loop_header
            %s110 = sphi 0, %s114
            %p111 = scmp.ge.s32.totalorder %s110, 1
            %s115 = sphi %s101, %s101
            %s116 = sphi [#allocation7], [#allocation7]
          $region102: #{self_attention_fused.3} parent=98 // loop_header_branch
            %113 = sbr.rel (%p111) target = $region106
          $region103: #{self_attention_fused.3} parent=98 // loop_body
            %v117 = vld [vmem:[%s115] sm:$0xf]
            %118 = vst [vmem:[%s116] sm:$0xf] %v117
            %v119 = vld [vmem:[%s115 + $0xc] sm:$0xf]
            %120 = vst [vmem:[%s116 + $0x4] sm:$0xf] %v119
          $region104: #{self_attention_fused.3} parent=98 // loop_footer
            %s114 = sadd.s32 1, %s110
          $region105: #{self_attention_fused.3} parent=98 // loop_footer_branch
            %109 = sbr.rel target = $region101
          $region106: #{self_attention_fused.3} parent=98 // loop_exit
            _
        $region99: #{self_attention_fused.3} parent=90 // pred_fallthru
          _
      $region91: #{self_attention_fused.3} parent=86 // pred_fallthru
        _
      %144 = vnop
    $region87: #{self_attention_fused.3} parent=1 // pred_fallthru
      _
    // Predicated region
    $region125: #{self_attention_fused.3} parent=1 // pred_check
      _
    $region126: #{self_attention_fused.3} parent=1 // pred_check_branch
      %146 = sbr.rel (0) target = $region128
    $region127: #{self_attention_fused.3} parent=1 // pred_region
      _
    $region128: #{self_attention_fused.3} parent=1 // pred_fallthru
      _
    // Predicated region
    $region129: #{self_attention_fused.3} parent=1 // pred_check
      _
    $region130: #{self_attention_fused.3} parent=1 // pred_check_branch
      %148 = sbr.rel (0) target = $region132
    $region131: #{self_attention_fused.3} parent=1 // pred_region
      _
    $region132: #{self_attention_fused.3} parent=1 // pred_fallthru
      _
    // Predicated region
    $region133: #{self_attention_fused.3} parent=1 // pred_check
      _
    $region134: #{self_attention_fused.3} parent=1 // pred_check_branch
      %150 = sbr.rel (0) target = $region136
    $region135: #{self_attention_fused.3} parent=1 // pred_region
      _
    $region136: #{self_attention_fused.3} parent=1 // pred_fallthru
      _
    %p152 = scmp.eq.s32.totalorder 0, 0
    // Predicated region
    $region137: #{self_attention_fused.3} parent=1 // pred_check
      %p153 = pneg %p152
    $region138: #{self_attention_fused.3} parent=1 // pred_check_branch
      %155 = sbr.rel (%p153) target = $region140
    $region139: #{self_attention_fused.3} parent=1 // pred_region
      %vm156 = vcmask 7168
      %157 = vst.msk [vmem:[#allocation2] sm:$0xff] %vm156, -inf
      %158 = vst.msk [vmem:[#allocation2 + $0x8] sm:$0xff] %vm156, -inf
      %159 = vst.msk [vmem:[#allocation3] sm:$0xff] %vm156, 0.0
      %160 = vst.msk [vmem:[#allocation3 + $0x8] sm:$0xff] %vm156, 0.0
      %161 = vst [vmem:[#allocation4] sm:$0xff] 0.0
      %162 = vst [vmem:[#allocation4 + $0x8] sm:$0xff] 0.0
    $region140: #{self_attention_fused.3} parent=1 // pred_fallthru
      _
    %v163 = vld [vmem:[#allocation5] sm:$0xf]
    %v164 = vld [vmem:[#allocation5 + $0x4] sm:$0xf]
    %v165 = vld [vmem:[#allocation6] sm:$0xf]
    %v166 = vld [vmem:[#allocation6 + $0x4] sm:$0xf]
    %v169 = vunpack.c.l.b16 %v163
    %v170 = vunpack.c.l.b16 %v164
    %v171 = vpack.c.b16 %v170, %v169
    %v175 = vunpack.c.l.b16 %v165
    %v176 = vunpack.c.l.b16 %v166
    %v177 = vpack.c.b16 %v176, %v175
    %179 = vmatprep.subr.bf16.mxu0 0
    %180 = vmatpush1.bf16.xpose.msra.mxu0 %v177
    %181 = vmatprep.subr.bf16.mxu0 0
    %182 = vmatpush1.bf16.xpose.msra.mxu0 0
    %183 = vmatprep.subr.bf16.mxu0 0
    %184 = vmatpush1.bf16.xpose.msra.mxu0 0
    %185 = vmatprep.subr.bf16.mxu0 0
    %186 = vmatpush1.bf16.xpose.msra.mxu0 0
    %187 = vmatprep.subr.bf16.mxu0 0
    %188 = vmatpush1.bf16.xpose.msra.mxu0 0
    %189 = vmatprep.subr.bf16.mxu0 0
    %190 = vmatpush1.bf16.xpose.msra.mxu0 0
    %191 = vmatprep.subr.bf16.mxu0 0
    %192 = vmatpush1.bf16.xpose.msra.mxu0 0
    %193 = vmatprep.subr.bf16.mxu0 0
    %194 = vmatpush1.bf16.xpose.msra.mxu0 0
    %195 = vmatprep.subr.bf16.mxu0 0
    %196 = vmatpush1.bf16.xpose.msra.mxu0 0
    %197 = vmatprep.subr.bf16.mxu0 0
    %198 = vmatpush1.bf16.xpose.msra.mxu0 0
    %199 = vmatprep.subr.bf16.mxu0 0
    %200 = vmatpush1.bf16.xpose.msra.mxu0 0
    %201 = vmatprep.subr.bf16.mxu0 0
    %202 = vmatpush1.bf16.xpose.msra.mxu0 0
    %203 = vmatprep.subr.bf16.mxu0 0
    %204 = vmatpush1.bf16.xpose.msra.mxu0 0
    %205 = vmatprep.subr.bf16.mxu0 0
    %206 = vmatpush1.bf16.xpose.msra.mxu0 0
    %207 = vmatprep.subr.bf16.mxu0 0
    %208 = vmatpush1.bf16.xpose.msra.mxu0 0
    %209 = vmatprep.subr.bf16.mxu0 0
    %210 = vmatpush1.bf16.xpose.msra.mxu0 0
    %211 = vmatprep.mubr.bf16.mxu0 0
    %212 = vmatmul.mubr.bf16.gmra.mrb[0].mxu0 %v171
    %v213 = vpop.f32.mrb[0].mxu0
    %v214 = vadd.f32 0.0, %v213
    %v215 = vpop.f32.mrb[0].mxu0
    %v216 = vpop.f32.mrb[0].mxu0
    %v217 = vadd.f32 0.0, %v216
    %v218 = vpop.f32.mrb[0].mxu0
    %219 = vdwg.mxu0
    %s220 = smul.u32 0, 16
    %v221 = vlaneseq
    %v222 = vand.u32 %v221, 127
    %v223 = vstv %s220
    %v224 = vadd.s32 %v223, %v222
    %vm225 = vcmp.lt.s32.totalorder %v224, 8
    %v226 = vsel %vm225, %v214, -1e+30
    %v227 = vsel %vm225, %v217, -1e+30
    %v228 = vld [vmem:[#allocation2] sm:$0xff]
    %v229 = vld [vmem:[#allocation2 + $0x8] sm:$0xff]
    %vm230 = vcmask 130048
    %v231 = vsel %vm230, %v226, -inf
    %232 = vmax.xlane.f32.xlu0 %v231
    %v233 = vpop.xlane.xlu0 %232
    %v234 = vsel %vm230, %v227, -inf
    %235 = vmax.xlane.f32.xlu0 %v234
    %v236 = vpop.xlane.xlu0 %235
    %v237 = vmax.f32 %v228, %v233
    %v238 = vmax.f32 %v229, %v236
    %v239 = vsub.f32 %v228, %v237
    %v240 = vsub.f32 %v229, %v238
    %v241 = vmul.f32 %v239, 1.442695
    %v242 = vpow.pop %v241
    %v243 = vmul.f32 %v240, 1.442695
    %v244 = vpow.pop %v243
    %246 = vset.pattern.permute.xlu0 0
    %247 = vperm.xlu0 %246, %v237
    %v248 = vpop.permute.xlu0 %247
    %251 = vset.pattern.permute.xlu0 0
    %252 = vperm.xlu0 %251, %v238
    %v253 = vpop.permute.xlu0 %252
    %v255 = vsub.f32 %v226, %v248
    %v256 = vsub.f32 %v227, %v253
    %v257 = vmul.f32 %v255, 1.442695
    %v258 = vpow.pop %v257
    %v259 = vmul.f32 %v256, 1.442695
    %v260 = vpow.pop %v259
    %v261 = vld [vmem:[#allocation3] sm:$0xff]
    %v262 = vld [vmem:[#allocation3 + $0x8] sm:$0xff]
    %v263 = vmul.f32 %v242, %v261
    %v264 = vmul.f32 %v244, %v262
    %v265 = vsel %vm230, %v258, 0.0
    %266 = vadd.xlane.f32.xlu0 %v265
    %v267 = vpop.xlane.xlu0 %266
    %v268 = vsel %vm230, %v260, 0.0
    %269 = vadd.xlane.f32.xlu0 %v268
    %v270 = vpop.xlane.xlu0 %269
    %v271 = vadd.f32 %v263, %v267
    %v272 = vadd.f32 %v264, %v270
    %vm273 = vcmask 7168
    %274 = vst.msk [vmem:[#allocation3] sm:$0xff] %vm273, %v271
    %275 = vst.msk [vmem:[#allocation3 + $0x8] sm:$0xff] %vm273, %v272
    %v276 = vld [vmem:[#allocation4] sm:$0xff]
    %v277 = vld [vmem:[#allocation4 + $0x8] sm:$0xff]
    %279 = vset.pattern.permute.xlu0 0
    %280 = vperm.xlu0 %279, %v242
    %v281 = vpop.permute.xlu0 %280
    %284 = vset.pattern.permute.xlu0 0
    %285 = vperm.xlu0 %284, %v244
    %v286 = vpop.permute.xlu0 %285
    %v288 = vmul.f32 %v281, %v276
    %v289 = vmul.f32 %v286, %v277
    %v290 = vpack.c.bf16 %v260, %v258
    %v291 = vld [vmem:[#allocation7] sm:$0xf]
    %v292 = vld [vmem:[#allocation7 + $0x4] sm:$0xf]
    %v295 = vunpack.c.l.b16 %v291
    %v296 = vunpack.c.l.b16 %v292
    %v297 = vpack.c.b16 %v296, %v295
    %v300 = vsel %vm230, %v290, 0
    %302 = vmatprep.subr.bf16.mxu0 0
    %303 = vmatpush1.bf16.msra.mxu0 %v297
    %304 = vmatprep.subr.bf16.mxu0 0
    %305 = vmatpush1.bf16.msra.mxu0 0
    %306 = vmatprep.subr.bf16.mxu0 0
    %307 = vmatpush1.bf16.msra.mxu0 0
    %308 = vmatprep.subr.bf16.mxu0 0
    %309 = vmatpush1.bf16.msra.mxu0 0
    %310 = vmatprep.subr.bf16.mxu0 0
    %311 = vmatpush1.bf16.msra.mxu0 0
    %312 = vmatprep.subr.bf16.mxu0 0
    %313 = vmatpush1.bf16.msra.mxu0 0
    %314 = vmatprep.subr.bf16.mxu0 0
    %315 = vmatpush1.bf16.msra.mxu0 0
    %316 = vmatprep.subr.bf16.mxu0 0
    %317 = vmatpush1.bf16.msra.mxu0 0
    %318 = vmatprep.subr.bf16.mxu0 0
    %319 = vmatpush1.bf16.msra.mxu0 0
    %320 = vmatprep.subr.bf16.mxu0 0
    %321 = vmatpush1.bf16.msra.mxu0 0
    %322 = vmatprep.subr.bf16.mxu0 0
    %323 = vmatpush1.bf16.msra.mxu0 0
    %324 = vmatprep.subr.bf16.mxu0 0
    %325 = vmatpush1.bf16.msra.mxu0 0
    %326 = vmatprep.subr.bf16.mxu0 0
    %327 = vmatpush1.bf16.msra.mxu0 0
    %328 = vmatprep.subr.bf16.mxu0 0
    %329 = vmatpush1.bf16.msra.mxu0 0
    %330 = vmatprep.subr.bf16.mxu0 0
    %331 = vmatpush1.bf16.msra.mxu0 0
    %332 = vmatprep.subr.bf16.mxu0 0
    %333 = vmatpush1.bf16.msra.mxu0 0
    %334 = vmatprep.mubr.bf16.mxu0 0
    %335 = vmatmul.mubr.bf16.gmra.mrb[0].mxu0 %v300
    %v336 = vpop.f32.mrb[0].mxu0
    %v337 = vadd.f32 0.0, %v336
    %v338 = vpop.f32.mrb[0].mxu0
    %v339 = vpop.f32.mrb[0].mxu0
    %v340 = vadd.f32 0.0, %v339
    %v341 = vpop.f32.mrb[0].mxu0
    %342 = vdwg.mxu0
    %v343 = vadd.f32 %v288, %v337
    %v344 = vadd.f32 %v289, %v340
    %345 = vst [vmem:[#allocation4] sm:$0xff] %v343
    %346 = vst [vmem:[#allocation4 + $0x8] sm:$0xff] %v344
    %347 = vst.msk [vmem:[#allocation2] sm:$0xff] %vm273, %v237
    %348 = vst.msk [vmem:[#allocation2 + $0x8] sm:$0xff] %vm273, %v238
    // Predicated region
    $region141: #{self_attention_fused.3} parent=1 // pred_check
      %p349 = pneg %p152
    $region142: #{self_attention_fused.3} parent=1 // pred_check_branch
      %351 = sbr.rel (%p349) target = $region144
    $region143: #{self_attention_fused.3} parent=1 // pred_region
      %v352 = vld [vmem:[#allocation3] sm:$0xff]
      %v353 = vld [vmem:[#allocation3 + $0x8] sm:$0xff]
      %v354 = vrcp.pop %v352
      %v355 = vrcp.pop %v353
      %v356 = vld [vmem:[#allocation4] sm:$0xff]
      %v357 = vld [vmem:[#allocation4 + $0x8] sm:$0xff]
      %359 = vset.pattern.permute.xlu0 0
      %360 = vperm.xlu0 %359, %v354
      %v361 = vpop.permute.xlu0 %360
      %364 = vset.pattern.permute.xlu0 0
      %365 = vperm.xlu0 %364, %v355
      %v366 = vpop.permute.xlu0 %365
      %v368 = vmul.f32 %v356, %v361
      %v369 = vmul.f32 %v357, %v366
      %370 = vst [vmem:[%s3] sm:$0xff] %v368
      %371 = vst [vmem:[%s3 + $0x8] sm:$0xff] %v369
    $region144: #{self_attention_fused.3} parent=1 // pred_fallthru
      _
    // Predicated region
    $region145: #{self_attention_fused.3} parent=1 // pred_check
      _
    $region146: #{self_attention_fused.3} parent=1 // pred_check_branch
      %373 = sbr.rel (0) target = $region148
    $region147: #{self_attention_fused.3} parent=1 // pred_region
      _
    $region148: #{self_attention_fused.3} parent=1 // pred_fallthru
      _
    // Predicated region
    $region149: #{self_attention_fused.3} parent=1 // pred_check
      _
    $region150: #{self_attention_fused.3} parent=1 // pred_check_branch
      %375 = sbr.rel (0) target = $region152
    $region151: #{self_attention_fused.3} parent=1 // pred_region
      _
    $region152: #{self_attention_fused.3} parent=1 // pred_fallthru
      _

// kernel: self_attention_fused.2
$region0: #{self_attention_fused.2}
  #allocation0 [shape = 'u32[]', space=smem, size = 0x4, offset = 0x4, fixed_abs, tag = 'smem constant byte address 0x4 - core index']
  #allocation1 [shape = 'u32[144,128]{1,0:T(1,128)}', space=vmem, size = 0x12000, scoped, tag = 'internal scratch']
  %s0 = inlined_call_operand.vmem [shape: bf16[16,128], index: 0, kind: input, shape index: {}]
  %s1 = inlined_call_operand.hbm [shape: bf16[128,384], index: 1, kind: input, shape index: {}]
  %s2 = inlined_call_operand.vmem [shape: bf16[16,384], index: 2, kind: output, shape index: {}]
  %s3 = sld [smem:[#allocation0]]
  $region22: #{self_attention_fused.2} parent=0
    _
  %s5 = ssub.s32 1, %s3
  %s6 = scalar_select 0, %s5, %s3
  $region1: #{self_attention_fused.2} parent=0
    #allocation2 [shape = 'u8[98304]{0}', space=vmem, size = 0x18000, scoped, tag = 'input window, operand 1, single buffered']
    #allocation3 [shape = 's32[1]{0}', space=sflag, size = 0x4, scoped, tag = 'scoped memory for self_attention_fused.2']
    %7 = vsyncpa [#allocation3], 0
    // Predicated region
    $region2: #{self_attention_fused.2} parent=1 // pred_check
      _
    $region3: #{self_attention_fused.2} parent=1 // pred_check_branch
      %9 = sbr.rel (0) target = $region5
    $region4: #{self_attention_fused.2} parent=1 // pred_region
      _
    $region5: #{self_attention_fused.2} parent=1 // pred_fallthru
      _
    // Predicated region
    $region6: #{self_attention_fused.2} parent=1 // pred_check
      _
    $region7: #{self_attention_fused.2} parent=1 // pred_check_branch
      %11 = sbr.rel (0) target = $region9
    $region8: #{self_attention_fused.2} parent=1 // pred_region
      %s13 = ssub.s32 3072, 3072
      %14 = vsyncadd [#allocation3], %s13
      %s15 = sshll.u32 [#allocation2], 4
      %s16 = int_to_ptr.vmem [resolvable:$true] %s15
      %21 = dma.hbm_to_vmem [thread:$0]  %s1, 3072, %s16, [#allocation3], 192, 192, 12
    $region9: #{self_attention_fused.2} parent=1 // pred_fallthru
      _
    // Predicated region
    $region10: #{self_attention_fused.2} parent=1 // pred_check
      _
    $region11: #{self_attention_fused.2} parent=1 // pred_check_branch
      %23 = sbr.rel (0) target = $region13
    $region12: #{self_attention_fused.2} parent=1 // pred_region
      %24 = dma.done [#allocation3], 3072
    $region13: #{self_attention_fused.2} parent=1 // pred_fallthru
      _
    %v26 = vld [vmem:[%s0] sm:$0xf]
    %v27 = vld [vmem:[%s0 + $0x4] sm:$0xf]
    %v28 = vld [vmem:[#allocation2] sm:$0xff]
    %v29 = vld [vmem:[#allocation2 + $0x8] sm:$0xf]
    %v30 = vld [vmem:[#allocation2 + $0xc] sm:$0xff]
    %v31 = vld [vmem:[#allocation2 + $0x14] sm:$0xf]
    %v32 = vld [vmem:[#allocation2 + $0x18] sm:$0xff]
    %v33 = vld [vmem:[#allocation2 + $0x20] sm:$0xf]
    %v34 = vld [vmem:[#allocation2 + $0x24] sm:$0xff]
    %v35 = vld [vmem:[#allocation2 + $0x2c] sm:$0xf]
    %v36 = vld [vmem:[#allocation2 + $0x30] sm:$0xff]
    %v37 = vld [vmem:[#allocation2 + $0x38] sm:$0xf]
    %v38 = vld [vmem:[#allocation2 + $0x3c] sm:$0xff]
    %v39 = vld [vmem:[#allocation2 + $0x44] sm:$0xf]
    %v40 = vld [vmem:[#allocation2 + $0x48] sm:$0xff]
    %v41 = vld [vmem:[#allocation2 + $0x50] sm:$0xf]
    %v42 = vld [vmem:[#allocation2 + $0x54] sm:$0xff]
    %v43 = vld [vmem:[#allocation2 + $0x5c] sm:$0xf]
    %v44 = vld [vmem:[#allocation2 + $0x60] sm:$0xff]
    %v45 = vld [vmem:[#allocation2 + $0x68] sm:$0xf]
    %v46 = vld [vmem:[#allocation2 + $0x6c] sm:$0xff]
    %v47 = vld [vmem:[#allocation2 + $0x74] sm:$0xf]
    %v48 = vld [vmem:[#allocation2 + $0x78] sm:$0xff]
    %v49 = vld [vmem:[#allocation2 + $0x80] sm:$0xf]
    %v50 = vld [vmem:[#allocation2 + $0x84] sm:$0xff]
    %v51 = vld [vmem:[#allocation2 + $0x8c] sm:$0xf]
    %v52 = vld [vmem:[#allocation2 + $0x90] sm:$0xff]
    %v53 = vld [vmem:[#allocation2 + $0x98] sm:$0xf]
    %v54 = vld [vmem:[#allocation2 + $0x9c] sm:$0xff]
    %v55 = vld [vmem:[#allocation2 + $0xa4] sm:$0xf]
    %v56 = vld [vmem:[#allocation2 + $0xa8] sm:$0xff]
    %v57 = vld [vmem:[#allocation2 + $0xb0] sm:$0xf]
    %v58 = vld [vmem:[#allocation2 + $0xb4] sm:$0xff]
    %v59 = vld [vmem:[#allocation2 + $0xbc] sm:$0xf]
    %v62 = vunpack.c.l.b16 %v26
    %v63 = vunpack.c.l.b16 %v27
    %v64 = vpack.c.b16 %v63, %v62
    %v98 = vunpack.c.l.b16 %v28
    %v99 = vunpack.c.h.b16 %v28
    %v100 = vunpack.c.l.b16 %v29
    %v101 = vunpack.c.l.b16 %v30
    %v102 = vunpack.c.h.b16 %v30
    %v103 = vunpack.c.l.b16 %v31
    %v104 = vunpack.c.l.b16 %v32
    %v105 = vunpack.c.h.b16 %v32
    %v106 = vunpack.c.l.b16 %v33
    %v107 = vunpack.c.l.b16 %v34
    %v108 = vunpack.c.h.b16 %v34
    %v109 = vunpack.c.l.b16 %v35
    %v110 = vunpack.c.l.b16 %v36
    %v111 = vunpack.c.h.b16 %v36
    %v112 = vunpack.c.l.b16 %v37
    %v113 = vunpack.c.l.b16 %v38
    %v114 = vunpack.c.h.b16 %v38
    %v115 = vunpack.c.l.b16 %v39
    %v116 = vunpack.c.l.b16 %v40
    %v117 = vunpack.c.h.b16 %v40
    %v118 = vunpack.c.l.b16 %v41
    %v119 = vunpack.c.l.b16 %v42
    %v120 = vunpack.c.h.b16 %v42
    %v121 = vunpack.c.l.b16 %v43
    %v122 = vunpack.c.l.b16 %v44
    %v123 = vunpack.c.h.b16 %v44
    %v124 = vunpack.c.l.b16 %v45
    %v125 = vunpack.c.l.b16 %v46
    %v126 = vunpack.c.h.b16 %v46
    %v127 = vunpack.c.l.b16 %v47
    %v128 = vunpack.c.l.b16 %v48
    %v129 = vunpack.c.h.b16 %v48
    %v130 = vunpack.c.l.b16 %v49
    %v131 = vunpack.c.l.b16 %v50
    %v132 = vunpack.c.h.b16 %v50
    %v133 = vunpack.c.l.b16 %v51
    %v134 = vunpack.c.l.b16 %v52
    %v135 = vunpack.c.h.b16 %v52
    %v136 = vunpack.c.l.b16 %v53
    %v137 = vunpack.c.l.b16 %v54
    %v138 = vunpack.c.h.b16 %v54
    %v139 = vunpack.c.l.b16 %v55
    %v140 = vunpack.c.l.b16 %v56
    %v141 = vunpack.c.h.b16 %v56
    %v142 = vunpack.c.l.b16 %v57
    %v143 = vunpack.c.l.b16 %v58
    %v144 = vunpack.c.h.b16 %v58
    %v145 = vunpack.c.l.b16 %v59
    %v146 = vpack.c.b16 %v101, %v98
    %v147 = vpack.c.b16 %v102, %v99
    %v148 = vpack.c.b16 %v103, %v100
    %v149 = vpack.c.b16 %v107, %v104
    %v150 = vpack.c.b16 %v108, %v105
    %v151 = vpack.c.b16 %v109, %v106
    %v152 = vpack.c.b16 %v113, %v110
    %v153 = vpack.c.b16 %v114, %v111
    %v154 = vpack.c.b16 %v115, %v112
    %v155 = vpack.c.b16 %v119, %v116
    %v156 = vpack.c.b16 %v120, %v117
    %v157 = vpack.c.b16 %v121, %v118
    %v158 = vpack.c.b16 %v125, %v122
    %v159 = vpack.c.b16 %v126, %v123
    %v160 = vpack.c.b16 %v127, %v124
    %v161 = vpack.c.b16 %v131, %v128
    %v162 = vpack.c.b16 %v132, %v129
    %v163 = vpack.c.b16 %v133, %v130
    %v164 = vpack.c.b16 %v137, %v134
    %v165 = vpack.c.b16 %v138, %v135
    %v166 = vpack.c.b16 %v139, %v136
    %v167 = vpack.c.b16 %v143, %v140
    %v168 = vpack.c.b16 %v144, %v141
    %v169 = vpack.c.b16 %v145, %v142
    %194 = vmatprep.subr.bf16.mxu0 %v147
    %195 = vmatpush1.bf16.msra.mxu0 %v146
    %196 = vmatprep.subr.bf16.mxu0 %v150
    %197 = vmatpush1.bf16.msra.mxu0 %v149
    %198 = vmatprep.subr.bf16.mxu0 %v153
    %199 = vmatpush1.bf16.msra.mxu0 %v152
    %200 = vmatprep.subr.bf16.mxu0 %v156
    %201 = vmatpush1.bf16.msra.mxu0 %v155
    %202 = vmatprep.subr.bf16.mxu0 %v159
    %203 = vmatpush1.bf16.msra.mxu0 %v158
    %204 = vmatprep.subr.bf16.mxu0 %v162
    %205 = vmatpush1.bf16.msra.mxu0 %v161
    %206 = vmatprep.subr.bf16.mxu0 %v165
    %207 = vmatpush1.bf16.msra.mxu0 %v164
    %208 = vmatprep.subr.bf16.mxu0 %v168
    %209 = vmatpush1.bf16.msra.mxu0 %v167
    %210 = vmatprep.subr.bf16.mxu0 0
    %211 = vmatpush1.bf16.msra.mxu0 0
    %212 = vmatprep.subr.bf16.mxu0 0
    %213 = vmatpush1.bf16.msra.mxu0 0
    %214 = vmatprep.subr.bf16.mxu0 0
    %215 = vmatpush1.bf16.msra.mxu0 0
    %216 = vmatprep.subr.bf16.mxu0 0
    %217 = vmatpush1.bf16.msra.mxu0 0
    %218 = vmatprep.subr.bf16.mxu0 0
    %219 = vmatpush1.bf16.msra.mxu0 0
    %220 = vmatprep.subr.bf16.mxu0 0
    %221 = vmatpush1.bf16.msra.mxu0 0
    %222 = vmatprep.subr.bf16.mxu0 0
    %223 = vmatpush1.bf16.msra.mxu0 0
    %224 = vmatprep.subr.bf16.mxu0 0
    %225 = vmatpush1.bf16.msra.mxu0 0
    %226 = vmatprep.mubr.bf16.mxu0 0
    %227 = vmatmul.mubr.bf16.gmra.mrb[0].mxu0 %v64
    %v228 = vpop.f32.mrb[0].mxu0
    %v229 = vadd.f32 0.0, %v228
    %v230 = vpop.f32.mrb[0].mxu0
    %v231 = vadd.f32 0.0, %v230
    %v232 = vpop.f32.mrb[0].mxu0
    %v233 = vadd.f32 0.0, %v232
    %v234 = vpop.f32.mrb[0].mxu0
    %v235 = vadd.f32 0.0, %v234
    %236 = vdwg.mxu0
    %237 = vmatprep.subr.bf16.mxu0 0
    %238 = vmatpush1.bf16.msra.mxu0 %v148
    %239 = vmatprep.subr.bf16.mxu0 0
    %240 = vmatpush1.bf16.msra.mxu0 %v151
    %241 = vmatprep.subr.bf16.mxu0 0
    %242 = vmatpush1.bf16.msra.mxu0 %v154
    %243 = vmatprep.subr.bf16.mxu0 0
    %244 = vmatpush1.bf16.msra.mxu0 %v157
    %245 = vmatprep.subr.bf16.mxu0 0
    %246 = vmatpush1.bf16.msra.mxu0 %v160
    %247 = vmatprep.subr.bf16.mxu0 0
    %248 = vmatpush1.bf16.msra.mxu0 %v163
    %249 = vmatprep.subr.bf16.mxu0 0
    %250 = vmatpush1.bf16.msra.mxu0 %v166
    %251 = vmatprep.subr.bf16.mxu0 0
    %252 = vmatpush1.bf16.msra.mxu0 %v169
    %253 = vmatprep.subr.bf16.mxu0 0
    %254 = vmatpush1.bf16.msra.mxu0 0
    %255 = vmatprep.subr.bf16.mxu0 0
    %256 = vmatpush1.bf16.msra.mxu0 0
    %257 = vmatprep.subr.bf16.mxu0 0
    %258 = vmatpush1.bf16.msra.mxu0 0
    %259 = vmatprep.subr.bf16.mxu0 0
    %260 = vmatpush1.bf16.msra.mxu0 0
    %261 = vmatprep.subr.bf16.mxu0 0
    %262 = vmatpush1.bf16.msra.mxu0 0
    %263 = vmatprep.subr.bf16.mxu0 0
    %264 = vmatpush1.bf16.msra.mxu0 0
    %265 = vmatprep.subr.bf16.mxu0 0
    %266 = vmatpush1.bf16.msra.mxu0 0
    %267 = vmatprep.subr.bf16.mxu0 0
    %268 = vmatpush1.bf16.msra.mxu0 0
    %269 = vmatprep.mubr.bf16.mxu0 0
    %270 = vmatmul.mubr.bf16.gmra.mrb[0].mxu0 %v64
    %v271 = vpop.f32.mrb[0].mxu0
    %v272 = vadd.f32 0.0, %v271
    %v273 = vpop.f32.mrb[0].mxu0
    %v274 = vpop.f32.mrb[0].mxu0
    %v275 = vadd.f32 0.0, %v274
    %v276 = vpop.f32.mrb[0].mxu0
    %277 = vdwg.mxu0
    %v278 = vpack.c.bf16 %v233, %v229
    %v279 = vpack.c.bf16 %v235, %v231
    %v280 = vpack.c.bf16 %v275, %v272
    %v284 = vunpack.c.l.b16 %v278
    %v285 = vunpack.c.l.b16 %v279
    %v286 = vunpack.c.l.b16 %v280
    %v287 = vunpack.c.h.b16 %v278
    %v288 = vunpack.c.h.b16 %v279
    %v289 = vunpack.c.h.b16 %v280
    %v290 = vpack.c.b16 %v285, %v284
    %v291 = vpack.c.b16 %v286, %v286
    %v292 = vpack.c.b16 %v288, %v287
    %v293 = vpack.c.b16 %v289, %v289
    %298 = vst [vmem:[%s2] sm:$0xff] %v290
    %299 = vst [vmem:[%s2 + $0x8] sm:$0xf] %v291
    %300 = vst [vmem:[%s2 + $0xc] sm:$0xff] %v292
    %301 = vst [vmem:[%s2 + $0x14] sm:$0xf] %v293
    // Predicated region
    $region14: #{self_attention_fused.2} parent=1 // pred_check
      _
    $region15: #{self_attention_fused.2} parent=1 // pred_check_branch
      %303 = sbr.rel (0) target = $region17
    $region16: #{self_attention_fused.2} parent=1 // pred_region
      _
    $region17: #{self_attention_fused.2} parent=1 // pred_fallthru
      _
    // Predicated region
    $region18: #{self_attention_fused.2} parent=1 // pred_check
      _
    $region19: #{self_attention_fused.2} parent=1 // pred_check_branch
      %305 = sbr.rel (0) target = $region21
    $region20: #{self_attention_fused.2} parent=1 // pred_region
      _
    $region21: #{self_attention_fused.2} parent=1 // pred_fallthru
      _
    %306 = vsyncpa [#allocation3], 1

</llo_original>
